<compile_context>
chip_gen: v5e
topology: v5e:2x2
jax: 0.10.0
libtpu: 0.0.40
codegen_flags: <defaults>
</compile_context>

<pallas_src>
import math

import jax
import jax.numpy as jnp
from jax.experimental import pallas as pl
from jax.experimental.pallas import tpu as pltpu


# ----------------------------- hparams ------------------------------------ #
class HParams:
    ar_channels = [32, 48, 48, 64]
    ar_kernel_sizes = [5, 3, 3]
    ar_stride = [1, 1, 1]
    ar_pooling = [1, 1, 1]
    ar_bias = True
    ar_batch_norm = False
    ar_batch_norm_affine = True
    ar_residual = True
    ar_self_attention = [False, False, False]
    ar_dropout = 0.0


# ------------------------- fused model builder ----------------------------- #
def build_fused_forward(blocks, N, C0, L0, out_dtype=jnp.float32,
                        mxu_dtype=jnp.float32):
    """Builds a single fused pallas_call covering every ConvolutionalArBlock.

    `mxu_dtype=jnp.bfloat16` is the optional v5e/v6e speed knob (bf16 MXU
    operands, f32 accumulate); default stays f32 for numerical fidelity at
    these tiny shapes.
    """
    # --- static per-layer metadata ------------------------------------------
    metas = []
    L = L0
    for _, cfg in blocks:
        C_in, C_out, K, stride, pool, residual, has_res_conv = cfg
        assert stride == 1 and pool == 1, (
            "TODO(synk): MaxPool1d(ceil_mode) / stride>1 not implemented")
        L_out = L - K + 1
        metas.append(dict(C_in=C_in, C_out=C_out, K=K, residual=residual,
                          has_res_conv=has_res_conv, L_in=L, L_out=L_out))
        L = L_out
    L_final, C_final = L, metas[-1]["C_out"]

    # --- hoisted weight repack (runs ONCE, not per forward) ------------------
    weight_args, weight_specs = [], []
    bias_rows, bias_off = [], {}
    off = 0
    for bi, ((params, _), m) in enumerate(zip(blocks, metas)):
        C_in, C_out, K = m["C_in"], m["C_out"], m["K"]
        # im2col weight: [o, t*C_in + i] = w[o, i, t]
        w_im = jnp.transpose(params["w"], (0, 2, 1)).reshape(C_out, K * C_in)
        weight_args.append(w_im)
        weight_specs.append(pl.BlockSpec((C_out, K * C_in), lambda n: (0, 0)))
        bias_rows.append(params["b"])
        bias_off[("b", bi)] = off
        off += C_out
        if m["has_res_conv"]:
            weight_args.append(params["rw"])
            weight_specs.append(pl.BlockSpec((C_out, C_in), lambda n: (0, 0)))
            bias_rows.append(params["rb"])
            bias_off[("rb", bi)] = off
            off += C_out
    # All biases packed into one buffer -> one DMA descriptor instead of five.
    bias_pack = jnp.concatenate(bias_rows, axis=0)            # (R, 1)
    R = bias_pack.shape[0]
    weight_args.append(bias_pack)
    weight_specs.append(pl.BlockSpec((R, 1), lambda n: (0, 0)))

    # --- fused kernel: all blocks, one batch element per grid step -----------
    def kernel(*refs):
        x_ref, o_ref, bias_ref = refs[0], refs[-1], refs[-2]
        w_refs = refs[1:-2]
        wi = 0
        h = x_ref[...].astype(jnp.float32)                    # (C0, L0)
        for bi, m in enumerate(metas):
            C_out, K = m["C_out"], m["K"]
            L_in, L_out = m["L_in"], m["L_out"]
            # im2col: stack K shifted views along sublanes -> (K*C_in, L_out)
            rhs = jnp.concatenate([h[:, t:t + L_out] for t in range(K)], axis=0)
            b_lo = bias_off[("b", bi)]
            b = bias_ref[b_lo:b_lo + C_out, :]                # (C_out, 1)
            w_im = w_refs[wi][...]
            wi += 1
            acc = jnp.dot(w_im.astype(mxu_dtype), rhs.astype(mxu_dtype),
                          preferred_element_type=jnp.float32) + b
            main = jnp.maximum(acc, 0.0)                      # ReLU
            if m["residual"]:
                r = h[:, L_in - L_out:]                       # last L_out steps
                if m["has_res_conv"]:
                    rw = w_refs[wi][...]
                    wi += 1
                    rb_lo = bias_off[("rb", bi)]
                    rb = bias_ref[rb_lo:rb_lo + C_out, :]
                    r = jnp.dot(rw.astype(mxu_dtype), r.astype(mxu_dtype),
                                preferred_element_type=jnp.float32) + rb
                main = main + r
            h = main                                          # stays on-chip
        o_ref[...] = h.astype(o_ref.dtype)

    # --- advisory cost estimate ----------------------------------------------
    flops = 0
    for m in metas:
        flops += 2 * N * m["C_out"] * m["K"] * m["C_in"] * m["L_out"]
        if m["residual"] and m["has_res_conv"]:
            flops += 2 * N * m["C_out"] * m["C_in"] * m["L_out"]
    bytes_accessed = 4 * (N * C0 * L0 + N * C_final * L_final
                          + sum(int(a.size) for a in weight_args))
    cost = pl.CostEstimate(flops=flops, transcendentals=0,
                           bytes_accessed=bytes_accessed)

    fwd = pl.pallas_call(
        kernel,
        out_shape=jax.ShapeDtypeStruct((N, C_final, L_final), out_dtype),
        grid=(N,),
        in_specs=[pl.BlockSpec((None, C0, L0), lambda n: (n, 0, 0))] + weight_specs,
        out_specs=pl.BlockSpec((None, C_final, L_final), lambda n: (n, 0, 0)),
        compiler_params=pltpu.CompilerParams(
            dimension_semantics=("parallel",)),   # v7x: one batch element per TC
        cost_estimate=cost,
    )

    def forward(x):
        assert x.shape == (N, C0, L0)
        return fwd(x, *weight_args)

    return forward


# ------------------------ pure-JAX reference ------------------------------- #
def ref_block(x, params, cfg):
    C_in, C_out, K, stride, pool, residual, has_res_conv = cfg
    N, _, L_in = x.shape
    L_out = L_in - K + 1
    w = params["w"]                                           # (C_out, C_in, K)
    acc = jnp.zeros((N, C_out, L_out), jnp.float32)
    for t in range(K):
        acc = acc + jnp.einsum("oi,nil->nol", w[:, :, t], x[:, :, t:t + L_out],
                               precision=jax.lax.Precision.HIGHEST)
    acc = acc + params["b"][None]
    main = jnp.maximum(acc, 0.0)
    if residual:
        r = x
        if has_res_conv:
            r = jnp.einsum("oi,nil->nol", params["rw"], r,
                           precision=jax.lax.Precision.HIGHEST) + params["rb"][None]
        main = main + r[:, :, -L_out:]
    return main


def ref_model(x, blocks):
    for params, cfg in blocks:
        x = ref_block(x, params, cfg)
    return x


# ------------------------ deterministic init ------------------------------- #
def init_model(hp, key):
    blocks = []
    for l in range(len(hp.ar_kernel_sizes)):
        C_in, C_out = hp.ar_channels[l], hp.ar_channels[l + 1]
        K = hp.ar_kernel_sizes[l]
        stride, pool = hp.ar_stride[l], hp.ar_pooling[l]
        residual = hp.ar_residual
        has_res_conv = residual and (C_in != C_out)
        key, k1, k2, k3, k4 = jax.random.split(key, 5)
        w = jax.random.normal(k1, (C_out, C_in, K), jnp.float32) / math.sqrt(C_in * K)
        if hp.ar_bias:
            b = jax.random.normal(k2, (C_out, 1), jnp.float32) * 0.01
        else:
            b = jnp.zeros((C_out, 1), jnp.float32)
        params = {"w": w, "b": b}
        if has_res_conv:
            params["rw"] = jax.random.normal(k3, (C_out, C_in), jnp.float32) / math.sqrt(C_in)
            params["rb"] = jax.random.normal(k4, (C_out, 1), jnp.float32) * 0.01
        cfg = (C_in, C_out, K, stride, pool, residual, has_res_conv)
        blocks.append((params, cfg))
    return blocks


# --------------------------------- main ------------------------------------ #
if __name__ == "__main__":
    hp = HParams()
    key = jax.random.PRNGKey(0)
    blocks = init_model(hp, key)

    key, xk = jax.random.split(key)
    N, C0, L0 = 2, hp.ar_channels[0], 64
    x = jax.random.normal(xk, (N, C0, L0), jnp.float32)

    forward = build_fused_forward(blocks, N, C0, L0)
    y = jax.block_until_ready(forward(x))

    y_ref = ref_model(x, blocks)
    L_final = L0 - sum(k - 1 for k in hp.ar_kernel_sizes)
    assert y.shape == (N, hp.ar_channels[-1], L_final)
    err = float(jnp.max(jnp.abs(y - y_ref)))
    assert err < 1e-3, f"mismatch vs reference: {err}"   # tightened from 1e-1

    print("KERNEL_OK")
</pallas_src>

<mosaic_0001>
module attributes {stable_mosaic.version = 11 : i64} {
  func.func @kernel(%arg0: i32, %arg1: memref<1x32x64xf32, #tpu.memory_space<vmem>>, %arg2: memref<48x160xf32, #tpu.memory_space<vmem>>, %arg3: memref<48x32xf32, #tpu.memory_space<vmem>>, %arg4: memref<48x144xf32, #tpu.memory_space<vmem>>, %arg5: memref<64x144xf32, #tpu.memory_space<vmem>>, %arg6: memref<64x48xf32, #tpu.memory_space<vmem>>, %arg7: memref<272x1xf32, #tpu.memory_space<vmem>>, %arg8: memref<1x64x56xf32, #tpu.memory_space<vmem>>) attributes {dimension_semantics = [#tpu.dimension_semantics<parallel>], iteration_bounds = array<i64: 2>, scalar_prefetch = 0 : i64, scratch_operands = 0 : i64, tpu.core_type = #tpu.core_type<tc>, window_params = [{transform_indices = @transform_0, window_bounds = array<i64: 1, 32, 64>}, {pipeline_mode = #tpu.pipeline_mode<synchronous>, transform_indices = @transform_1, window_bounds = array<i64: 48, 160>}, {pipeline_mode = #tpu.pipeline_mode<synchronous>, transform_indices = @transform_2, window_bounds = array<i64: 48, 32>}, {pipeline_mode = #tpu.pipeline_mode<synchronous>, transform_indices = @transform_3, window_bounds = array<i64: 48, 144>}, {pipeline_mode = #tpu.pipeline_mode<synchronous>, transform_indices = @transform_4, window_bounds = array<i64: 64, 144>}, {pipeline_mode = #tpu.pipeline_mode<synchronous>, transform_indices = @transform_5, window_bounds = array<i64: 64, 48>}, {pipeline_mode = #tpu.pipeline_mode<synchronous>, transform_indices = @transform_6, window_bounds = array<i64: 272, 1>}, {transform_indices = @transform_7, window_bounds = array<i64: 1, 64, 56>}]} {
    %c0 = arith.constant 0 : index
    %c0_0 = arith.constant 0 : index
    %c0_1 = arith.constant 0 : index
    %0 = vector.load %arg1[%c0, %c0_0, %c0_1] : memref<1x32x64xf32, #tpu.memory_space<vmem>>, vector<1x32x64xf32>
    %1 = vector.shape_cast %0 : vector<1x32x64xf32> to vector<32x64xf32>
    %2 = vector.extract_strided_slice %1 {offsets = [0, 0], sizes = [32, 60], strides = [1, 1]} : vector<32x64xf32> to vector<32x60xf32>
    %3 = vector.extract_strided_slice %1 {offsets = [0, 1], sizes = [32, 60], strides = [1, 1]} : vector<32x64xf32> to vector<32x60xf32>
    %4 = vector.extract_strided_slice %1 {offsets = [0, 2], sizes = [32, 60], strides = [1, 1]} : vector<32x64xf32> to vector<32x60xf32>
    %5 = vector.extract_strided_slice %1 {offsets = [0, 3], sizes = [32, 60], strides = [1, 1]} : vector<32x64xf32> to vector<32x60xf32>
    %6 = vector.extract_strided_slice %1 {offsets = [0, 4], sizes = [32, 60], strides = [1, 1]} : vector<32x64xf32> to vector<32x60xf32>
    %7 = tpu.concatenate %2, %3, %4, %5, %6 in 0 : vector<32x60xf32>, vector<32x60xf32>, vector<32x60xf32>, vector<32x60xf32>, vector<32x60xf32> -> vector<160x60xf32>
    %c0_2 = arith.constant 0 : index
    %c0_3 = arith.constant 0 : index
    %8 = vector.load %arg7[%c0_2, %c0_3] : memref<272x1xf32, #tpu.memory_space<vmem>>, vector<48x1xf32>
    %c0_4 = arith.constant 0 : index
    %c0_5 = arith.constant 0 : index
    %9 = vector.load %arg2[%c0_4, %c0_5] : memref<48x160xf32, #tpu.memory_space<vmem>>, vector<48x160xf32>
    %cst = arith.constant dense<0.000000e+00> : vector<48x60xf32>
    %10 = tpu.matmul %9, %7, %cst {dimension_numbers = #tpu.dot_dimension_numbers<[1], [0], [0], [1], [0, 0, 1, 1], [], []>} : vector<48x160xf32>, vector<160x60xf32>, vector<48x60xf32> -> vector<48x60xf32>
    %11 = vector.broadcast %8 : vector<48x1xf32> to vector<48x60xf32>
    %12 = arith.addf %10, %11 : vector<48x60xf32>
    %cst_6 = arith.constant 0.000000e+00 : f32
    %13 = vector.broadcast %cst_6 : f32 to vector<48x60xf32>
    %14 = arith.maximumf %12, %13 : vector<48x60xf32>
    %15 = vector.extract_strided_slice %1 {offsets = [0, 4], sizes = [32, 60], strides = [1, 1]} : vector<32x64xf32> to vector<32x60xf32>
    %c0_7 = arith.constant 0 : index
    %c0_8 = arith.constant 0 : index
    %16 = vector.load %arg3[%c0_7, %c0_8] : memref<48x32xf32, #tpu.memory_space<vmem>>, vector<48x32xf32>
    %c48 = arith.constant 48 : index
    %c0_9 = arith.constant 0 : index
    %17 = vector.load %arg7[%c48, %c0_9] : memref<272x1xf32, #tpu.memory_space<vmem>>, vector<48x1xf32>
    %cst_10 = arith.constant dense<0.000000e+00> : vector<48x60xf32>
    %18 = tpu.matmul %16, %15, %cst_10 {dimension_numbers = #tpu.dot_dimension_numbers<[1], [0], [0], [1], [0, 0, 1, 1], [], []>} : vector<48x32xf32>, vector<32x60xf32>, vector<48x60xf32> -> vector<48x60xf32>
    %19 = vector.broadcast %17 : vector<48x1xf32> to vector<48x60xf32>
    %20 = arith.addf %18, %19 : vector<48x60xf32>
    %21 = arith.addf %14, %20 : vector<48x60xf32>
    %22 = vector.extract_strided_slice %21 {offsets = [0, 0], sizes = [48, 58], strides = [1, 1]} : vector<48x60xf32> to vector<48x58xf32>
    %23 = vector.extract_strided_slice %21 {offsets = [0, 1], sizes = [48, 58], strides = [1, 1]} : vector<48x60xf32> to vector<48x58xf32>
    %24 = vector.extract_strided_slice %21 {offsets = [0, 2], sizes = [48, 58], strides = [1, 1]} : vector<48x60xf32> to vector<48x58xf32>
    %25 = tpu.concatenate %22, %23, %24 in 0 : vector<48x58xf32>, vector<48x58xf32>, vector<48x58xf32> -> vector<144x58xf32>
    %c96 = arith.constant 96 : index
    %c0_11 = arith.constant 0 : index
    %26 = vector.load %arg7[%c96, %c0_11] : memref<272x1xf32, #tpu.memory_space<vmem>>, vector<48x1xf32>
    %c0_12 = arith.constant 0 : index
    %c0_13 = arith.constant 0 : index
    %27 = vector.load %arg4[%c0_12, %c0_13] : memref<48x144xf32, #tpu.memory_space<vmem>>, vector<48x144xf32>
    %cst_14 = arith.constant dense<0.000000e+00> : vector<48x58xf32>
    %28 = tpu.matmul %27, %25, %cst_14 {dimension_numbers = #tpu.dot_dimension_numbers<[1], [0], [0], [1], [0, 0, 1, 1], [], []>} : vector<48x144xf32>, vector<144x58xf32>, vector<48x58xf32> -> vector<48x58xf32>
    %29 = vector.broadcast %26 : vector<48x1xf32> to vector<48x58xf32>
    %30 = arith.addf %28, %29 : vector<48x58xf32>
    %cst_15 = arith.constant 0.000000e+00 : f32
    %31 = vector.broadcast %cst_15 : f32 to vector<48x58xf32>
    %32 = arith.maximumf %30, %31 : vector<48x58xf32>
    %33 = vector.extract_strided_slice %21 {offsets = [0, 2], sizes = [48, 58], strides = [1, 1]} : vector<48x60xf32> to vector<48x58xf32>
    %34 = arith.addf %32, %33 : vector<48x58xf32>
    %35 = vector.extract_strided_slice %34 {offsets = [0, 0], sizes = [48, 56], strides = [1, 1]} : vector<48x58xf32> to vector<48x56xf32>
    %36 = vector.extract_strided_slice %34 {offsets = [0, 1], sizes = [48, 56], strides = [1, 1]} : vector<48x58xf32> to vector<48x56xf32>
    %37 = vector.extract_strided_slice %34 {offsets = [0, 2], sizes = [48, 56], strides = [1, 1]} : vector<48x58xf32> to vector<48x56xf32>
    %38 = tpu.concatenate %35, %36, %37 in 0 : vector<48x56xf32>, vector<48x56xf32>, vector<48x56xf32> -> vector<144x56xf32>
    %c144 = arith.constant 144 : index
    %c0_16 = arith.constant 0 : index
    %39 = vector.load %arg7[%c144, %c0_16] : memref<272x1xf32, #tpu.memory_space<vmem>>, vector<64x1xf32>
    %c0_17 = arith.constant 0 : index
    %c0_18 = arith.constant 0 : index
    %40 = vector.load %arg5[%c0_17, %c0_18] : memref<64x144xf32, #tpu.memory_space<vmem>>, vector<64x144xf32>
    %cst_19 = arith.constant dense<0.000000e+00> : vector<64x56xf32>
    %41 = tpu.matmul %40, %38, %cst_19 {dimension_numbers = #tpu.dot_dimension_numbers<[1], [0], [0], [1], [0, 0, 1, 1], [], []>} : vector<64x144xf32>, vector<144x56xf32>, vector<64x56xf32> -> vector<64x56xf32>
    %42 = vector.broadcast %39 : vector<64x1xf32> to vector<64x56xf32>
    %43 = arith.addf %41, %42 : vector<64x56xf32>
    %cst_20 = arith.constant 0.000000e+00 : f32
    %44 = vector.broadcast %cst_20 : f32 to vector<64x56xf32>
    %45 = arith.maximumf %43, %44 : vector<64x56xf32>
    %46 = vector.extract_strided_slice %34 {offsets = [0, 2], sizes = [48, 56], strides = [1, 1]} : vector<48x58xf32> to vector<48x56xf32>
    %c0_21 = arith.constant 0 : index
    %c0_22 = arith.constant 0 : index
    %47 = vector.load %arg6[%c0_21, %c0_22] : memref<64x48xf32, #tpu.memory_space<vmem>>, vector<64x48xf32>
    %c208 = arith.constant 208 : index
    %c0_23 = arith.constant 0 : index
    %48 = vector.load %arg7[%c208, %c0_23] : memref<272x1xf32, #tpu.memory_space<vmem>>, vector<64x1xf32>
    %cst_24 = arith.constant dense<0.000000e+00> : vector<64x56xf32>
    %49 = tpu.matmul %47, %46, %cst_24 {dimension_numbers = #tpu.dot_dimension_numbers<[1], [0], [0], [1], [0, 0, 1, 1], [], []>} : vector<64x48xf32>, vector<48x56xf32>, vector<64x56xf32> -> vector<64x56xf32>
    %50 = vector.broadcast %48 : vector<64x1xf32> to vector<64x56xf32>
    %51 = arith.addf %49, %50 : vector<64x56xf32>
    %52 = arith.addf %45, %51 : vector<64x56xf32>
    %c0_25 = arith.constant 0 : index
    %c0_26 = arith.constant 0 : index
    %c0_27 = arith.constant 0 : index
    %53 = vector.load %arg8[%c0_25, %c0_26, %c0_27] : memref<1x64x56xf32, #tpu.memory_space<vmem>>, vector<1x64x56xf32>
    %54 = vector.shape_cast %53 : vector<1x64x56xf32> to vector<64x56xf32>
    %55 = vector.shape_cast %52 : vector<64x56xf32> to vector<1x64x56xf32>
    tpu.vector_store %arg8[%c0_25, %c0_26, %c0_27], %55 {strides = array<i32>} : memref<1x64x56xf32, #tpu.memory_space<vmem>>, vector<1x64x56xf32>,
    return
  }
  func.func @transform_0(%arg0: i32) -> (i32, i32, i32) {
    %c0_i32 = arith.constant 0 : i32
    %c0_i32_0 = arith.constant 0 : i32
    %c0_i32_1 = arith.constant 0 : i32
    return %arg0, %c0_i32, %c0_i32_0 : i32, i32, i32
  }
  func.func @transform_1(%arg0: i32) -> (i32, i32) {
    %c0_i32 = arith.constant 0 : i32
    %c0_i32_0 = arith.constant 0 : i32
    %c0_i32_1 = arith.constant 0 : i32
    return %c0_i32, %c0_i32_0 : i32, i32
  }
  func.func @transform_2(%arg0: i32) -> (i32, i32) {
    %c0_i32 = arith.constant 0 : i32
    %c0_i32_0 = arith.constant 0 : i32
    %c0_i32_1 = arith.constant 0 : i32
    return %c0_i32, %c0_i32_0 : i32, i32
  }
  func.func @transform_3(%arg0: i32) -> (i32, i32) {
    %c0_i32 = arith.constant 0 : i32
    %c0_i32_0 = arith.constant 0 : i32
    %c0_i32_1 = arith.constant 0 : i32
    return %c0_i32, %c0_i32_0 : i32, i32
  }
  func.func @transform_4(%arg0: i32) -> (i32, i32) {
    %c0_i32 = arith.constant 0 : i32
    %c0_i32_0 = arith.constant 0 : i32
    %c0_i32_1 = arith.constant 0 : i32
    return %c0_i32, %c0_i32_0 : i32, i32
  }
  func.func @transform_5(%arg0: i32) -> (i32, i32) {
    %c0_i32 = arith.constant 0 : i32
    %c0_i32_0 = arith.constant 0 : i32
    %c0_i32_1 = arith.constant 0 : i32
    return %c0_i32, %c0_i32_0 : i32, i32
  }
  func.func @transform_6(%arg0: i32) -> (i32, i32) {
    %c0_i32 = arith.constant 0 : i32
    %c0_i32_0 = arith.constant 0 : i32
    %c0_i32_1 = arith.constant 0 : i32
    return %c0_i32, %c0_i32_0 : i32, i32
  }
  func.func @transform_7(%arg0: i32) -> (i32, i32, i32) {
    %c0_i32 = arith.constant 0 : i32
    %c0_i32_0 = arith.constant 0 : i32
    %c0_i32_1 = arith.constant 0 : i32
    return %arg0, %c0_i32, %c0_i32_0 : i32, i32, i32
  }
}

</mosaic_0001>

<llo_original>
// kernel: tpu_custom_call.1
$region0: #{tpu_custom_call.1}
  #allocation0 [shape = 'u32[]', space=smem, size = 0x4, offset = 0x4, fixed_abs, tag = 'smem constant byte address 0x4 - core index']
  #allocation1 [shape = 'u32[72,128]{1,0:T(1,128)}', space=vmem, size = 0x9000, scoped, tag = 'internal scratch']
  %s0 = inlined_call_operand.vmem [shape: f32[2,32,64], index: 0, kind: input, shape index: {}]
  %s1 = inlined_call_operand.vmem [shape: f32[48,160], index: 1, kind: input, shape index: {}]
  %s2 = inlined_call_operand.vmem [shape: f32[48,32], index: 2, kind: input, shape index: {}]
  %s3 = inlined_call_operand.vmem [shape: f32[48,144], index: 3, kind: input, shape index: {}]
  %s4 = inlined_call_operand.vmem [shape: f32[64,144], index: 4, kind: input, shape index: {}]
  %s5 = inlined_call_operand.vmem [shape: f32[64,48], index: 5, kind: input, shape index: {}]
  %s6 = inlined_call_operand.vmem [shape: f32[272,1], index: 6, kind: input, shape index: {}]
  %s7 = inlined_call_operand.vmem [shape: f32[2,64,56], index: 7, kind: output, shape index: {}]
  %s8 = sld [smem:[#allocation0]]
  $region61: #{tpu_custom_call.1} parent=0
    _
  %s10 = ssub.s32 1, %s8
  %s11 = scalar_select 0, %s10, %s8
  loop: start=0, step=1, limit=4
  $region2: #{tpu_custom_call.1} parent=0 // loop_pre_header
    _
  $region3: #{tpu_custom_call.1} parent=0 // loop_header
    %s13 = sphi 0, %s17
    %p14 = scmp.ge.s32.totalorder %s13, 4
    %s23 = sphi 0, %s25
    %s26 = sphi 0, %s23
    %s27 = sphi 0, %s26
    %s43 = sphi 0, %s27
    %s47 = sphi 0, %s47
    %s49 = sphi 0, %s47
    %s50 = sphi 0, %s49
    %s64 = sphi 0, %s50
    %s68 = sphi 0, %s68
    %s70 = sphi 0, %s68
    %s71 = sphi 0, %s70
    %s85 = sphi 0, %s71
    %s89 = sphi 0, %s89
    %s91 = sphi 0, %s89
    %s92 = sphi 0, %s91
    %s106 = sphi 0, %s92
    %s110 = sphi 0, %s110
    %s112 = sphi 0, %s110
    %s113 = sphi 0, %s112
    %s127 = sphi 0, %s113
    %s131 = sphi 0, %s131
    %s133 = sphi 0, %s131
    %s134 = sphi 0, %s133
    %s148 = sphi 0, %s134
    %s152 = sphi 0, %s152
    %s154 = sphi 0, %s152
    %s155 = sphi 0, %s154
    %s169 = sphi 0, %s155
    %s175 = sphi 0, %s177
    %s178 = sphi 0, %s175
    %s179 = sphi 0, %s178
    %s195 = sphi 0, %s179
  $region4: #{tpu_custom_call.1} parent=0 // loop_header_branch
    %16 = sbr.rel (%p14) target = $region8
  $region5: #{tpu_custom_call.1} parent=0 // loop_body
    %s18 = ssub.s32 %s13, 1
    %s19 = ssub.s32 %s13, 2
    %s20 = sadd.s32 %s13, 1
    %s21 = ssub.s32 %s13, %s20
    %p22 = scmp.eq.s32.totalorder %s21, 0
    %s24 = sadd.s32 %s23, 1
    %s25 = scalar_select %p22, %s23, %s24
    %p28 = pneg %p22
    %p29 = scmp.eq.s32.totalorder %s13, 1
    %p30 = por %p28, %p29
    %p31 = scmp.ne.s32.totalorder %s23, %s26
    %p32 = scmp.eq.s32.totalorder %s13, 0
    %p33 = por %p31, %p32
    %p34 = scmp.ne.s32.totalorder %s23, %s26
    %p35 = scmp.eq.s32.totalorder %s18, 1
    %p36 = por %p34, %p35
    %p37 = scmp.ne.s32.totalorder %s26, %s27
    %p38 = scmp.eq.s32.totalorder %s18, 0
    %p39 = por %p37, %p38
    %p40 = scmp.ne.s32.totalorder %s26, %s27
    %p41 = scmp.eq.s32.totalorder %s19, 1
    %p42 = por %p40, %p41
    %p44 = scmp.ne.s32.totalorder %s27, %s43
    %p45 = scmp.eq.s32.totalorder %s19, 0
    %p46 = por %p44, %p45
    %s48 = sadd.s32 %s47, 1
    %p51 = scmp.eq.s32.totalorder %s13, 1
    %p52 = scmp.ne.s32.totalorder %s47, %s49
    %p53 = scmp.eq.s32.totalorder %s13, 0
    %p54 = por %p52, %p53
    %p55 = scmp.ne.s32.totalorder %s47, %s49
    %p56 = scmp.eq.s32.totalorder %s18, 1
    %p57 = por %p55, %p56
    %p58 = scmp.ne.s32.totalorder %s49, %s50
    %p59 = scmp.eq.s32.totalorder %s18, 0
    %p60 = por %p58, %p59
    %p61 = scmp.ne.s32.totalorder %s49, %s50
    %p62 = scmp.eq.s32.totalorder %s19, 1
    %p63 = por %p61, %p62
    %p65 = scmp.ne.s32.totalorder %s50, %s64
    %p66 = scmp.eq.s32.totalorder %s19, 0
    %p67 = por %p65, %p66
    %s69 = sadd.s32 %s68, 1
    %p72 = scmp.eq.s32.totalorder %s13, 1
    %p73 = scmp.ne.s32.totalorder %s68, %s70
    %p74 = scmp.eq.s32.totalorder %s13, 0
    %p75 = por %p73, %p74
    %p76 = scmp.ne.s32.totalorder %s68, %s70
    %p77 = scmp.eq.s32.totalorder %s18, 1
    %p78 = por %p76, %p77
    %p79 = scmp.ne.s32.totalorder %s70, %s71
    %p80 = scmp.eq.s32.totalorder %s18, 0
    %p81 = por %p79, %p80
    %p82 = scmp.ne.s32.totalorder %s70, %s71
    %p83 = scmp.eq.s32.totalorder %s19, 1
    %p84 = por %p82, %p83
    %p86 = scmp.ne.s32.totalorder %s71, %s85
    %p87 = scmp.eq.s32.totalorder %s19, 0
    %p88 = por %p86, %p87
    %s90 = sadd.s32 %s89, 1
    %p93 = scmp.eq.s32.totalorder %s13, 1
    %p94 = scmp.ne.s32.totalorder %s89, %s91
    %p95 = scmp.eq.s32.totalorder %s13, 0
    %p96 = por %p94, %p95
    %p97 = scmp.ne.s32.totalorder %s89, %s91
    %p98 = scmp.eq.s32.totalorder %s18, 1
    %p99 = por %p97, %p98
    %p100 = scmp.ne.s32.totalorder %s91, %s92
    %p101 = scmp.eq.s32.totalorder %s18, 0
    %p102 = por %p100, %p101
    %p103 = scmp.ne.s32.totalorder %s91, %s92
    %p104 = scmp.eq.s32.totalorder %s19, 1
    %p105 = por %p103, %p104
    %p107 = scmp.ne.s32.totalorder %s92, %s106
    %p108 = scmp.eq.s32.totalorder %s19, 0
    %p109 = por %p107, %p108
    %s111 = sadd.s32 %s110, 1
    %p114 = scmp.eq.s32.totalorder %s13, 1
    %p115 = scmp.ne.s32.totalorder %s110, %s112
    %p116 = scmp.eq.s32.totalorder %s13, 0
    %p117 = por %p115, %p116
    %p118 = scmp.ne.s32.totalorder %s110, %s112
    %p119 = scmp.eq.s32.totalorder %s18, 1
    %p120 = por %p118, %p119
    %p121 = scmp.ne.s32.totalorder %s112, %s113
    %p122 = scmp.eq.s32.totalorder %s18, 0
    %p123 = por %p121, %p122
    %p124 = scmp.ne.s32.totalorder %s112, %s113
    %p125 = scmp.eq.s32.totalorder %s19, 1
    %p126 = por %p124, %p125
    %p128 = scmp.ne.s32.totalorder %s113, %s127
    %p129 = scmp.eq.s32.totalorder %s19, 0
    %p130 = por %p128, %p129
    %s132 = sadd.s32 %s131, 1
    %p135 = scmp.eq.s32.totalorder %s13, 1
    %p136 = scmp.ne.s32.totalorder %s131, %s133
    %p137 = scmp.eq.s32.totalorder %s13, 0
    %p138 = por %p136, %p137
    %p139 = scmp.ne.s32.totalorder %s131, %s133
    %p140 = scmp.eq.s32.totalorder %s18, 1
    %p141 = por %p139, %p140
    %p142 = scmp.ne.s32.totalorder %s133, %s134
    %p143 = scmp.eq.s32.totalorder %s18, 0
    %p144 = por %p142, %p143
    %p145 = scmp.ne.s32.totalorder %s133, %s134
    %p146 = scmp.eq.s32.totalorder %s19, 1
    %p147 = por %p145, %p146
    %p149 = scmp.ne.s32.totalorder %s134, %s148
    %p150 = scmp.eq.s32.totalorder %s19, 0
    %p151 = por %p149, %p150
    %s153 = sadd.s32 %s152, 1
    %p156 = scmp.eq.s32.totalorder %s13, 1
    %p157 = scmp.ne.s32.totalorder %s152, %s154
    %p158 = scmp.eq.s32.totalorder %s13, 0
    %p159 = por %p157, %p158
    %p160 = scmp.ne.s32.totalorder %s152, %s154
    %p161 = scmp.eq.s32.totalorder %s18, 1
    %p162 = por %p160, %p161
    %p163 = scmp.ne.s32.totalorder %s154, %s155
    %p164 = scmp.eq.s32.totalorder %s18, 0
    %p165 = por %p163, %p164
    %p166 = scmp.ne.s32.totalorder %s154, %s155
    %p167 = scmp.eq.s32.totalorder %s19, 1
    %p168 = por %p166, %p167
    %p170 = scmp.ne.s32.totalorder %s155, %s169
    %p171 = scmp.eq.s32.totalorder %s19, 0
    %p172 = por %p170, %p171
    %s173 = ssub.s32 %s13, %s20
    %p174 = scmp.eq.s32.totalorder %s173, 0
    %s176 = sadd.s32 %s175, 1
    %s177 = scalar_select %p174, %s175, %s176
    %p180 = pneg %p174
    %p181 = scmp.eq.s32.totalorder %s13, 1
    %p182 = por %p180, %p181
    %p183 = scmp.ne.s32.totalorder %s175, %s178
    %p184 = scmp.eq.s32.totalorder %s13, 0
    %p185 = por %p183, %p184
    %p186 = scmp.ne.s32.totalorder %s175, %s178
    %p187 = scmp.eq.s32.totalorder %s18, 1
    %p188 = por %p186, %p187
    %p189 = scmp.ne.s32.totalorder %s178, %s179
    %p190 = scmp.eq.s32.totalorder %s18, 0
    %p191 = por %p189, %p190
    %p192 = scmp.ne.s32.totalorder %s178, %s179
    %p193 = scmp.eq.s32.totalorder %s19, 1
    %p194 = por %p192, %p193
    %p196 = scmp.ne.s32.totalorder %s179, %s195
    %p197 = scmp.eq.s32.totalorder %s19, 0
    %p198 = por %p196, %p197
    %p199 = scmp.le.s32.totalorder 1, %s13
    %p200 = scmp.lt.s32.totalorder %s13, 3
    %p201 = pnand %p199, %p200
    %p202 = pneg %p201
    // Predicated region
    $region9: #{tpu_custom_call.1} parent=5 // pred_check
      _
    $region10: #{tpu_custom_call.1} parent=5 // pred_check_branch
      %204 = sbr.rel (%p201) target = $region12
    $region11: #{tpu_custom_call.1} parent=5 // pred_region
      %s205 = ssub.s32 %s13, 1
      // Predicated region
      $region13: #{tpu_custom_call.1} parent=11 // pred_check
        %p206 = pneg %p60
      $region14: #{tpu_custom_call.1} parent=11 // pred_check_branch
        %208 = sbr.rel (%p206) target = $region16
      $region15: #{tpu_custom_call.1} parent=11 // pred_region
        _
      $region16: #{tpu_custom_call.1} parent=11 // pred_fallthru
        _
      // Predicated region
      $region17: #{tpu_custom_call.1} parent=11 // pred_check
        %p209 = pneg %p81
      $region18: #{tpu_custom_call.1} parent=11 // pred_check_branch
        %211 = sbr.rel (%p209) target = $region20
      $region19: #{tpu_custom_call.1} parent=11 // pred_region
        _
      $region20: #{tpu_custom_call.1} parent=11 // pred_fallthru
        _
      // Predicated region
      $region21: #{tpu_custom_call.1} parent=11 // pred_check
        %p212 = pneg %p102
      $region22: #{tpu_custom_call.1} parent=11 // pred_check_branch
        %214 = sbr.rel (%p212) target = $region24
      $region23: #{tpu_custom_call.1} parent=11 // pred_region
        _
      $region24: #{tpu_custom_call.1} parent=11 // pred_fallthru
        _
      // Predicated region
      $region25: #{tpu_custom_call.1} parent=11 // pred_check
        %p215 = pneg %p123
      $region26: #{tpu_custom_call.1} parent=11 // pred_check_branch
        %217 = sbr.rel (%p215) target = $region28
      $region27: #{tpu_custom_call.1} parent=11 // pred_region
        _
      $region28: #{tpu_custom_call.1} parent=11 // pred_fallthru
        _
      // Predicated region
      $region29: #{tpu_custom_call.1} parent=11 // pred_check
        %p218 = pneg %p144
      $region30: #{tpu_custom_call.1} parent=11 // pred_check_branch
        %220 = sbr.rel (%p218) target = $region32
      $region31: #{tpu_custom_call.1} parent=11 // pred_region
        _
      $region32: #{tpu_custom_call.1} parent=11 // pred_fallthru
        _
      // Predicated region
      $region33: #{tpu_custom_call.1} parent=11 // pred_check
        %p221 = pneg %p165
      $region34: #{tpu_custom_call.1} parent=11 // pred_check_branch
        %223 = sbr.rel (%p221) target = $region36
      $region35: #{tpu_custom_call.1} parent=11 // pred_region
        _
      $region36: #{tpu_custom_call.1} parent=11 // pred_fallthru
        _
    $region12: #{tpu_custom_call.1} parent=5 // pred_fallthru
      _
    %p224 = scmp.lt.s32.totalorder %s13, 2
    // Predicated region
    $region37: #{tpu_custom_call.1} parent=5 // pred_check
      %p225 = pneg %p224
    $region38: #{tpu_custom_call.1} parent=5 // pred_check_branch
      %227 = sbr.rel (%p225) target = $region40
    $region39: #{tpu_custom_call.1} parent=5 // pred_region
      // Predicated region
      $region41: #{tpu_custom_call.1} parent=39 // pred_check
        %p228 = pneg %p33
      $region42: #{tpu_custom_call.1} parent=39 // pred_check_branch
        %230 = sbr.rel (%p228) target = $region44
      $region43: #{tpu_custom_call.1} parent=39 // pred_region
        %p231 = scmp.lt.s32.totalorder %s13, 1
        %s232 = scalar_select %p231, %s13, 1
        %s233 = smul.addr %s232, 4
        %s234 = smul.addr %s233, 8
        %s235 = scalar_lea.vmem %s0, %s234
      $region44: #{tpu_custom_call.1} parent=39 // pred_fallthru
        _
    $region40: #{tpu_custom_call.1} parent=5 // pred_fallthru
      _
    %p236 = scmp.le.s32.totalorder 1, %s13
    %p237 = scmp.lt.s32.totalorder %s13, 3
    %p238 = pnand %p236, %p237
    %p239 = pneg %p238
    // Predicated region
    $region45: #{tpu_custom_call.1} parent=5 // pred_check
      _
    $region46: #{tpu_custom_call.1} parent=5 // pred_check_branch
      %241 = sbr.rel (%p238) target = $region48
    $region47: #{tpu_custom_call.1} parent=5 // pred_region
      %s242 = ssub.s32 %s13, 1
      %p243 = scmp.lt.s32.totalorder %s18, 1
      %s244 = scalar_select %p243, %s18, 1
      %s245 = smul.addr %s244, 4
      %s246 = smul.addr %s245, 8
      %s247 = scalar_lea.vmem %s0, %s246
      %p248 = pneg %p39
      %p249 = pneg %p36
      %p250 = pneg %p60
      %p251 = pneg %p57
      %p252 = pneg %p81
      %p253 = pneg %p78
      %p254 = pneg %p102
      %p255 = pneg %p99
      %p256 = pneg %p123
      %p257 = pneg %p120
      %p258 = pneg %p144
      %p259 = pneg %p141
      %p260 = pneg %p165
      %p261 = pneg %p162
      %p262 = pneg %p191
      %p263 = pneg %p188
      %p264 = scmp.lt.s32.totalorder %s18, 1
      %s265 = scalar_select %p264, %s18, 1
      %s266 = smul.addr %s265, 8
      %s267 = smul.addr %s266, 8
      %s268 = scalar_lea.vmem %s7, %s267
      %p269 = scmp.lt.s32.totalorder %s18, 1
      %s270 = scalar_select %p269, %s18, 1
      %s271 = smul.addr %s270, 4
      %s272 = smul.addr %s271, 8
      %s273 = scalar_lea.vmem %s0, %s272
      %p274 = scmp.lt.s32.totalorder %s18, 1
      %s275 = scalar_select %p274, %s18, 1
      %s276 = smul.addr %s275, 8
      %s277 = smul.addr %s276, 8
      %s278 = scalar_lea.vmem %s7, %s277
      %v279 = vld [vmem:[%s273] sm:$0xff]
      %v280 = vld [vmem:[%s273 + $0x8] sm:$0xff]
      %v281 = vld [vmem:[%s273 + $0x10] sm:$0xff]
      %v282 = vld [vmem:[%s273 + $0x18] sm:$0xff]
      %287 = vrot.lane.b32.xlu0 %v279, 127
      %v288 = vpop.permute.xlu0 %287
      %289 = vrot.lane.b32.xlu0 %v280, 127
      %v290 = vpop.permute.xlu0 %289
      %291 = vrot.lane.b32.xlu0 %v281, 127
      %v292 = vpop.permute.xlu0 %291
      %293 = vrot.lane.b32.xlu0 %v282, 127
      %v294 = vpop.permute.xlu0 %293
      %299 = vrot.lane.b32.xlu0 %v279, 126
      %v300 = vpop.permute.xlu0 %299
      %301 = vrot.lane.b32.xlu0 %v280, 126
      %v302 = vpop.permute.xlu0 %301
      %303 = vrot.lane.b32.xlu0 %v281, 126
      %v304 = vpop.permute.xlu0 %303
      %305 = vrot.lane.b32.xlu0 %v282, 126
      %v306 = vpop.permute.xlu0 %305
      %311 = vrot.lane.b32.xlu0 %v279, 125
      %v312 = vpop.permute.xlu0 %311
      %313 = vrot.lane.b32.xlu0 %v280, 125
      %v314 = vpop.permute.xlu0 %313
      %315 = vrot.lane.b32.xlu0 %v281, 125
      %v316 = vpop.permute.xlu0 %315
      %317 = vrot.lane.b32.xlu0 %v282, 125
      %v318 = vpop.permute.xlu0 %317
      %323 = vrot.lane.b32.xlu0 %v279, 124
      %v324 = vpop.permute.xlu0 %323
      %325 = vrot.lane.b32.xlu0 %v280, 124
      %v326 = vpop.permute.xlu0 %325
      %327 = vrot.lane.b32.xlu0 %v281, 124
      %v328 = vpop.permute.xlu0 %327
      %329 = vrot.lane.b32.xlu0 %v282, 124
      %v330 = vpop.permute.xlu0 %329
      %v335 = vld [vmem:[%s6] sm:$0xff]
      %v336 = vld [vmem:[%s6 + $0x8] sm:$0xff]
      %v337 = vld [vmem:[%s6 + $0x10] sm:$0xff]
      %v338 = vld [vmem:[%s6 + $0x18] sm:$0xff]
      %v339 = vld [vmem:[%s6 + $0x20] sm:$0xff]
      %v340 = vld [vmem:[%s6 + $0x28] sm:$0xff]
      %v341 = vld [vmem:[%s1] sm:$0xff]
      %v342 = vld [vmem:[%s1 + $0x8] sm:$0xff]
      %v343 = vld [vmem:[%s1 + $0x10] sm:$0xff]
      %v344 = vld [vmem:[%s1 + $0x18] sm:$0xff]
      %v345 = vld [vmem:[%s1 + $0x20] sm:$0xff]
      %v346 = vld [vmem:[%s1 + $0x28] sm:$0xff]
      %v347 = vld [vmem:[%s1 + $0x30] sm:$0xff]
      %v348 = vld [vmem:[%s1 + $0x38] sm:$0xff]
      %v349 = vld [vmem:[%s1 + $0x40] sm:$0xff]
      %v350 = vld [vmem:[%s1 + $0x48] sm:$0xff]
      %v351 = vld [vmem:[%s1 + $0x50] sm:$0xff]
      %v352 = vld [vmem:[%s1 + $0x58] sm:$0xff]
      %354 = vset.pattern.permute.xlu0 0
      %355 = vperm.xlu0 %354, %v335
      %v356 = vpop.permute.xlu0 %355
      %359 = vset.pattern.permute.xlu0 0
      %360 = vperm.xlu0 %359, %v336
      %v361 = vpop.permute.xlu0 %360
      %364 = vset.pattern.permute.xlu0 0
      %365 = vperm.xlu0 %364, %v337
      %v366 = vpop.permute.xlu0 %365
      %369 = vset.pattern.permute.xlu0 0
      %370 = vperm.xlu0 %369, %v338
      %v371 = vpop.permute.xlu0 %370
      %374 = vset.pattern.permute.xlu0 0
      %375 = vperm.xlu0 %374, %v339
      %v376 = vpop.permute.xlu0 %375
      %379 = vset.pattern.permute.xlu0 0
      %380 = vperm.xlu0 %379, %v340
      %v381 = vpop.permute.xlu0 %380
      %vm383 = vcmask 261120
      %v385 = vsel %vm383, %v342, 0
      %v388 = vsel %vm383, %v344, 0
      %v391 = vsel %vm383, %v346, 0
      %v394 = vsel %vm383, %v348, 0
      %v397 = vsel %vm383, %v350, 0
      %v400 = vsel %vm383, %v352, 0
      %402 = vmatpush.msra.mxu0 %v318
      %403 = vmatpush.msra.mxu0 %v316
      %404 = vmatpush.msra.mxu0 %v314
      %405 = vmatpush.msra.mxu0 %v312
      %406 = vmatpush.msra.mxu0 %v306
      %407 = vmatpush.msra.mxu0 %v304
      %408 = vmatpush.msra.mxu0 %v302
      %409 = vmatpush.msra.mxu0 %v300
      %410 = vmatpush.msra.mxu0 %v294
      %411 = vmatpush.msra.mxu0 %v292
      %412 = vmatpush.msra.mxu0 %v290
      %413 = vmatpush.msra.mxu0 %v288
      %414 = vmatpush.msra.mxu0 %v282
      %415 = vmatpush.msra.mxu0 %v281
      %416 = vmatpush.msra.mxu0 %v280
      %417 = vmatpush.msra.mxu0 %v279
      %418 = vmatmul.f32.gmra.mxu0 %v341
      %v419 = vpop.f32.mrf.mxu0
      %v420 = vadd.f32 %v356, %v419
      %421 = vmatmul.f32.gmra.mxu0 %v343
      %v422 = vpop.f32.mrf.mxu0
      %v423 = vadd.f32 %v361, %v422
      %424 = vmatmul.f32.gmra.mxu0 %v345
      %v425 = vpop.f32.mrf.mxu0
      %v426 = vadd.f32 %v366, %v425
      %427 = vmatmul.f32.gmra.mxu0 %v347
      %v428 = vpop.f32.mrf.mxu0
      %v429 = vadd.f32 %v371, %v428
      %430 = vmatmul.f32.gmra.mxu0 %v349
      %v431 = vpop.f32.mrf.mxu0
      %v432 = vadd.f32 %v376, %v431
      %433 = vmatmul.f32.gmra.mxu0 %v351
      %v434 = vpop.f32.mrf.mxu0
      %v435 = vadd.f32 %v381, %v434
      %436 = vdwg.mxu0
      %437 = vmatpush.msra.mxu0 0.0
      %438 = vmatpush.msra.mxu0 0.0
      %439 = vmatpush.msra.mxu0 0.0
      %440 = vmatpush.msra.mxu0 0.0
      %441 = vmatpush.msra.mxu0 0.0
      %442 = vmatpush.msra.mxu0 0.0
      %443 = vmatpush.msra.mxu0 0.0
      %444 = vmatpush.msra.mxu0 0.0
      %445 = vmatpush.msra.mxu0 0.0
      %446 = vmatpush.msra.mxu0 0.0
      %447 = vmatpush.msra.mxu0 0.0
      %448 = vmatpush.msra.mxu0 0.0
      %449 = vmatpush.msra.mxu0 %v330
      %450 = vmatpush.msra.mxu0 %v328
      %451 = vmatpush.msra.mxu0 %v326
      %452 = vmatpush.msra.mxu0 %v324
      %453 = vmatmul.f32.gmra.mxu0 %v385
      %v454 = vpop.f32.mrf.mxu0
      %v455 = vadd.f32 %v420, %v454
      %456 = vmatmul.f32.gmra.mxu0 %v388
      %v457 = vpop.f32.mrf.mxu0
      %v458 = vadd.f32 %v423, %v457
      %459 = vmatmul.f32.gmra.mxu0 %v391
      %v460 = vpop.f32.mrf.mxu0
      %v461 = vadd.f32 %v426, %v460
      %462 = vmatmul.f32.gmra.mxu0 %v394
      %v463 = vpop.f32.mrf.mxu0
      %v464 = vadd.f32 %v429, %v463
      %465 = vmatmul.f32.gmra.mxu0 %v397
      %v466 = vpop.f32.mrf.mxu0
      %v467 = vadd.f32 %v432, %v466
      %468 = vmatmul.f32.gmra.mxu0 %v400
      %v469 = vpop.f32.mrf.mxu0
      %v470 = vadd.f32 %v435, %v469
      %471 = vdwg.mxu0
      %v472 = vmax.f32 %v455, 0.0
      %v473 = vmax.f32 %v458, 0.0
      %v474 = vmax.f32 %v461, 0.0
      %v475 = vmax.f32 %v464, 0.0
      %v476 = vmax.f32 %v467, 0.0
      %v477 = vmax.f32 %v470, 0.0
      %v478 = vld [vmem:[%s2] sm:$0xff]
      %v479 = vld [vmem:[%s2 + $0x8] sm:$0xff]
      %v480 = vld [vmem:[%s2 + $0x10] sm:$0xff]
      %v481 = vld [vmem:[%s2 + $0x18] sm:$0xff]
      %v482 = vld [vmem:[%s2 + $0x20] sm:$0xff]
      %v483 = vld [vmem:[%s2 + $0x28] sm:$0xff]
      %v484 = vld [vmem:[%s6 + $0x30] sm:$0xff]
      %v485 = vld [vmem:[%s6 + $0x38] sm:$0xff]
      %v486 = vld [vmem:[%s6 + $0x40] sm:$0xff]
      %v487 = vld [vmem:[%s6 + $0x48] sm:$0xff]
      %v488 = vld [vmem:[%s6 + $0x50] sm:$0xff]
      %v489 = vld [vmem:[%s6 + $0x58] sm:$0xff]
      %491 = vset.pattern.permute.xlu0 0
      %492 = vperm.xlu0 %491, %v484
      %v493 = vpop.permute.xlu0 %492
      %496 = vset.pattern.permute.xlu0 0
      %497 = vperm.xlu0 %496, %v485
      %v498 = vpop.permute.xlu0 %497
      %501 = vset.pattern.permute.xlu0 0
      %502 = vperm.xlu0 %501, %v486
      %v503 = vpop.permute.xlu0 %502
      %506 = vset.pattern.permute.xlu0 0
      %507 = vperm.xlu0 %506, %v487
      %v508 = vpop.permute.xlu0 %507
      %511 = vset.pattern.permute.xlu0 0
      %512 = vperm.xlu0 %511, %v488
      %v513 = vpop.permute.xlu0 %512
      %516 = vset.pattern.permute.xlu0 0
      %517 = vperm.xlu0 %516, %v489
      %v518 = vpop.permute.xlu0 %517
      %v521 = vsel %vm383, %v478, 0
      %v524 = vsel %vm383, %v479, 0
      %v527 = vsel %vm383, %v480, 0
      %v530 = vsel %vm383, %v481, 0
      %v533 = vsel %vm383, %v482, 0
      %v536 = vsel %vm383, %v483, 0
      %538 = vmatpush.msra.mxu0 0.0
      %539 = vmatpush.msra.mxu0 0.0
      %540 = vmatpush.msra.mxu0 0.0
      %541 = vmatpush.msra.mxu0 0.0
      %542 = vmatpush.msra.mxu0 0.0
      %543 = vmatpush.msra.mxu0 0.0
      %544 = vmatpush.msra.mxu0 0.0
      %545 = vmatpush.msra.mxu0 0.0
      %546 = vmatpush.msra.mxu0 0.0
      %547 = vmatpush.msra.mxu0 0.0
      %548 = vmatpush.msra.mxu0 0.0
      %549 = vmatpush.msra.mxu0 0.0
      %550 = vmatpush.msra.mxu0 %v330
      %551 = vmatpush.msra.mxu0 %v328
      %552 = vmatpush.msra.mxu0 %v326
      %553 = vmatpush.msra.mxu0 %v324
      %554 = vmatmul.f32.gmra.mxu0 %v521
      %v555 = vpop.f32.mrf.mxu0
      %v556 = vadd.f32 %v493, %v555
      %557 = vmatmul.f32.gmra.mxu0 %v524
      %v558 = vpop.f32.mrf.mxu0
      %v559 = vadd.f32 %v498, %v558
      %560 = vmatmul.f32.gmra.mxu0 %v527
      %v561 = vpop.f32.mrf.mxu0
      %v562 = vadd.f32 %v503, %v561
      %563 = vmatmul.f32.gmra.mxu0 %v530
      %v564 = vpop.f32.mrf.mxu0
      %v565 = vadd.f32 %v508, %v564
      %566 = vmatmul.f32.gmra.mxu0 %v533
      %v567 = vpop.f32.mrf.mxu0
      %v568 = vadd.f32 %v513, %v567
      %569 = vmatmul.f32.gmra.mxu0 %v536
      %v570 = vpop.f32.mrf.mxu0
      %v571 = vadd.f32 %v518, %v570
      %572 = vdwg.mxu0
      %v573 = vadd.f32 %v472, %v556
      %v574 = vadd.f32 %v473, %v559
      %v575 = vadd.f32 %v474, %v562
      %v576 = vadd.f32 %v475, %v565
      %v577 = vadd.f32 %v476, %v568
      %v578 = vadd.f32 %v477, %v571
      %585 = vrot.lane.b32.xlu0 %v573, 127
      %v586 = vpop.permute.xlu0 %585
      %587 = vrot.lane.b32.xlu0 %v574, 127
      %v588 = vpop.permute.xlu0 %587
      %589 = vrot.lane.b32.xlu0 %v575, 127
      %v590 = vpop.permute.xlu0 %589
      %591 = vrot.lane.b32.xlu0 %v576, 127
      %v592 = vpop.permute.xlu0 %591
      %593 = vrot.lane.b32.xlu0 %v577, 127
      %v594 = vpop.permute.xlu0 %593
      %595 = vrot.lane.b32.xlu0 %v578, 127
      %v596 = vpop.permute.xlu0 %595
      %603 = vrot.lane.b32.xlu0 %v573, 126
      %v604 = vpop.permute.xlu0 %603
      %605 = vrot.lane.b32.xlu0 %v574, 126
      %v606 = vpop.permute.xlu0 %605
      %607 = vrot.lane.b32.xlu0 %v575, 126
      %v608 = vpop.permute.xlu0 %607
      %609 = vrot.lane.b32.xlu0 %v576, 126
      %v610 = vpop.permute.xlu0 %609
      %611 = vrot.lane.b32.xlu0 %v577, 126
      %v612 = vpop.permute.xlu0 %611
      %613 = vrot.lane.b32.xlu0 %v578, 126
      %v614 = vpop.permute.xlu0 %613
      %v621 = vld [vmem:[%s6 + $0x60] sm:$0xff]
      %v622 = vld [vmem:[%s6 + $0x68] sm:$0xff]
      %v623 = vld [vmem:[%s6 + $0x70] sm:$0xff]
      %v624 = vld [vmem:[%s6 + $0x78] sm:$0xff]
      %v625 = vld [vmem:[%s6 + $0x80] sm:$0xff]
      %v626 = vld [vmem:[%s6 + $0x88] sm:$0xff]
      %v627 = vld [vmem:[%s3] sm:$0xff]
      %v628 = vld [vmem:[%s3 + $0x8] sm:$0xff]
      %v629 = vld [vmem:[%s3 + $0x10] sm:$0xff]
      %v630 = vld [vmem:[%s3 + $0x18] sm:$0xff]
      %v631 = vld [vmem:[%s3 + $0x20] sm:$0xff]
      %v632 = vld [vmem:[%s3 + $0x28] sm:$0xff]
      %v633 = vld [vmem:[%s3 + $0x30] sm:$0xff]
      %v634 = vld [vmem:[%s3 + $0x38] sm:$0xff]
      %v635 = vld [vmem:[%s3 + $0x40] sm:$0xff]
      %v636 = vld [vmem:[%s3 + $0x48] sm:$0xff]
      %v637 = vld [vmem:[%s3 + $0x50] sm:$0xff]
      %v638 = vld [vmem:[%s3 + $0x58] sm:$0xff]
      %640 = vset.pattern.permute.xlu0 0
      %641 = vperm.xlu0 %640, %v621
      %v642 = vpop.permute.xlu0 %641
      %645 = vset.pattern.permute.xlu0 0
      %646 = vperm.xlu0 %645, %v622
      %v647 = vpop.permute.xlu0 %646
      %650 = vset.pattern.permute.xlu0 0
      %651 = vperm.xlu0 %650, %v623
      %v652 = vpop.permute.xlu0 %651
      %655 = vset.pattern.permute.xlu0 0
      %656 = vperm.xlu0 %655, %v624
      %v657 = vpop.permute.xlu0 %656
      %660 = vset.pattern.permute.xlu0 0
      %661 = vperm.xlu0 %660, %v625
      %v662 = vpop.permute.xlu0 %661
      %665 = vset.pattern.permute.xlu0 0
      %666 = vperm.xlu0 %665, %v626
      %v667 = vpop.permute.xlu0 %666
      %vm669 = vcmask 130048
      %v671 = vsel %vm669, %v628, 0
      %v674 = vsel %vm669, %v630, 0
      %v677 = vsel %vm669, %v632, 0
      %v680 = vsel %vm669, %v634, 0
      %v683 = vsel %vm669, %v636, 0
      %v686 = vsel %vm669, %v638, 0
      %688 = vmatpush.msra.mxu0 %v610
      %689 = vmatpush.msra.mxu0 %v608
      %690 = vmatpush.msra.mxu0 %v606
      %691 = vmatpush.msra.mxu0 %v604
      %692 = vmatpush.msra.mxu0 %v596
      %693 = vmatpush.msra.mxu0 %v594
      %694 = vmatpush.msra.mxu0 %v592
      %695 = vmatpush.msra.mxu0 %v590
      %696 = vmatpush.msra.mxu0 %v588
      %697 = vmatpush.msra.mxu0 %v586
      %698 = vmatpush.msra.mxu0 %v578
      %699 = vmatpush.msra.mxu0 %v577
      %700 = vmatpush.msra.mxu0 %v576
      %701 = vmatpush.msra.mxu0 %v575
      %702 = vmatpush.msra.mxu0 %v574
      %703 = vmatpush.msra.mxu0 %v573
      %704 = vmatmul.f32.gmra.mxu0 %v627
      %v705 = vpop.f32.mrf.mxu0
      %v706 = vadd.f32 %v642, %v705
      %707 = vmatmul.f32.gmra.mxu0 %v629
      %v708 = vpop.f32.mrf.mxu0
      %v709 = vadd.f32 %v647, %v708
      %710 = vmatmul.f32.gmra.mxu0 %v631
      %v711 = vpop.f32.mrf.mxu0
      %v712 = vadd.f32 %v652, %v711
      %713 = vmatmul.f32.gmra.mxu0 %v633
      %v714 = vpop.f32.mrf.mxu0
      %v715 = vadd.f32 %v657, %v714
      %716 = vmatmul.f32.gmra.mxu0 %v635
      %v717 = vpop.f32.mrf.mxu0
      %v718 = vadd.f32 %v662, %v717
      %719 = vmatmul.f32.gmra.mxu0 %v637
      %v720 = vpop.f32.mrf.mxu0
      %v721 = vadd.f32 %v667, %v720
      %722 = vdwg.mxu0
      %723 = vmatpush.msra.mxu0 0.0
      %724 = vmatpush.msra.mxu0 0.0
      %725 = vmatpush.msra.mxu0 0.0
      %726 = vmatpush.msra.mxu0 0.0
      %727 = vmatpush.msra.mxu0 0.0
      %728 = vmatpush.msra.mxu0 0.0
      %729 = vmatpush.msra.mxu0 0.0
      %730 = vmatpush.msra.mxu0 0.0
      %731 = vmatpush.msra.mxu0 0.0
      %732 = vmatpush.msra.mxu0 0.0
      %733 = vmatpush.msra.mxu0 0.0
      %734 = vmatpush.msra.mxu0 0.0
      %735 = vmatpush.msra.mxu0 0.0
      %736 = vmatpush.msra.mxu0 0.0
      %737 = vmatpush.msra.mxu0 %v614
      %738 = vmatpush.msra.mxu0 %v612
      %739 = vmatmul.f32.gmra.mxu0 %v671
      %v740 = vpop.f32.mrf.mxu0
      %v741 = vadd.f32 %v706, %v740
      %742 = vmatmul.f32.gmra.mxu0 %v674
      %v743 = vpop.f32.mrf.mxu0
      %v744 = vadd.f32 %v709, %v743
      %745 = vmatmul.f32.gmra.mxu0 %v677
      %v746 = vpop.f32.mrf.mxu0
      %v747 = vadd.f32 %v712, %v746
      %748 = vmatmul.f32.gmra.mxu0 %v680
      %v749 = vpop.f32.mrf.mxu0
      %v750 = vadd.f32 %v715, %v749
      %751 = vmatmul.f32.gmra.mxu0 %v683
      %v752 = vpop.f32.mrf.mxu0
      %v753 = vadd.f32 %v718, %v752
      %754 = vmatmul.f32.gmra.mxu0 %v686
      %v755 = vpop.f32.mrf.mxu0
      %v756 = vadd.f32 %v721, %v755
      %757 = vdwg.mxu0
      %v758 = vmax.f32 %v741, 0.0
      %v759 = vmax.f32 %v744, 0.0
      %v760 = vmax.f32 %v747, 0.0
      %v761 = vmax.f32 %v750, 0.0
      %v762 = vmax.f32 %v753, 0.0
      %v763 = vmax.f32 %v756, 0.0
      %v764 = vadd.f32 %v758, %v604
      %v765 = vadd.f32 %v759, %v606
      %v766 = vadd.f32 %v760, %v608
      %v767 = vadd.f32 %v761, %v610
      %v768 = vadd.f32 %v762, %v612
      %v769 = vadd.f32 %v763, %v614
      %776 = vrot.lane.b32.xlu0 %v764, 127
      %v777 = vpop.permute.xlu0 %776
      %778 = vrot.lane.b32.xlu0 %v765, 127
      %v779 = vpop.permute.xlu0 %778
      %780 = vrot.lane.b32.xlu0 %v766, 127
      %v781 = vpop.permute.xlu0 %780
      %782 = vrot.lane.b32.xlu0 %v767, 127
      %v783 = vpop.permute.xlu0 %782
      %784 = vrot.lane.b32.xlu0 %v768, 127
      %v785 = vpop.permute.xlu0 %784
      %786 = vrot.lane.b32.xlu0 %v769, 127
      %v787 = vpop.permute.xlu0 %786
      %794 = vrot.lane.b32.xlu0 %v764, 126
      %v795 = vpop.permute.xlu0 %794
      %796 = vrot.lane.b32.xlu0 %v765, 126
      %v797 = vpop.permute.xlu0 %796
      %798 = vrot.lane.b32.xlu0 %v766, 126
      %v799 = vpop.permute.xlu0 %798
      %800 = vrot.lane.b32.xlu0 %v767, 126
      %v801 = vpop.permute.xlu0 %800
      %802 = vrot.lane.b32.xlu0 %v768, 126
      %v803 = vpop.permute.xlu0 %802
      %804 = vrot.lane.b32.xlu0 %v769, 126
      %v805 = vpop.permute.xlu0 %804
      %v812 = vld [vmem:[%s6 + $0x90] sm:$0xff]
      %v813 = vld [vmem:[%s6 + $0x98] sm:$0xff]
      %v814 = vld [vmem:[%s6 + $0xa0] sm:$0xff]
      %v815 = vld [vmem:[%s6 + $0xa8] sm:$0xff]
      %v816 = vld [vmem:[%s6 + $0xb0] sm:$0xff]
      %v817 = vld [vmem:[%s6 + $0xb8] sm:$0xff]
      %v818 = vld [vmem:[%s6 + $0xc0] sm:$0xff]
      %v819 = vld [vmem:[%s6 + $0xc8] sm:$0xff]
      %v820 = vld [vmem:[%s4] sm:$0xff]
      %v821 = vld [vmem:[%s4 + $0x8] sm:$0xff]
      %v822 = vld [vmem:[%s4 + $0x10] sm:$0xff]
      %v823 = vld [vmem:[%s4 + $0x18] sm:$0xff]
      %v824 = vld [vmem:[%s4 + $0x20] sm:$0xff]
      %v825 = vld [vmem:[%s4 + $0x28] sm:$0xff]
      %v826 = vld [vmem:[%s4 + $0x30] sm:$0xff]
      %v827 = vld [vmem:[%s4 + $0x38] sm:$0xff]
      %v828 = vld [vmem:[%s4 + $0x40] sm:$0xff]
      %v829 = vld [vmem:[%s4 + $0x48] sm:$0xff]
      %v830 = vld [vmem:[%s4 + $0x50] sm:$0xff]
      %v831 = vld [vmem:[%s4 + $0x58] sm:$0xff]
      %v832 = vld [vmem:[%s4 + $0x60] sm:$0xff]
      %v833 = vld [vmem:[%s4 + $0x68] sm:$0xff]
      %v834 = vld [vmem:[%s4 + $0x70] sm:$0xff]
      %v835 = vld [vmem:[%s4 + $0x78] sm:$0xff]
      %837 = vset.pattern.permute.xlu0 0
      %838 = vperm.xlu0 %837, %v812
      %v839 = vpop.permute.xlu0 %838
      %842 = vset.pattern.permute.xlu0 0
      %843 = vperm.xlu0 %842, %v813
      %v844 = vpop.permute.xlu0 %843
      %847 = vset.pattern.permute.xlu0 0
      %848 = vperm.xlu0 %847, %v814
      %v849 = vpop.permute.xlu0 %848
      %852 = vset.pattern.permute.xlu0 0
      %853 = vperm.xlu0 %852, %v815
      %v854 = vpop.permute.xlu0 %853
      %857 = vset.pattern.permute.xlu0 0
      %858 = vperm.xlu0 %857, %v816
      %v859 = vpop.permute.xlu0 %858
      %862 = vset.pattern.permute.xlu0 0
      %863 = vperm.xlu0 %862, %v817
      %v864 = vpop.permute.xlu0 %863
      %867 = vset.pattern.permute.xlu0 0
      %868 = vperm.xlu0 %867, %v818
      %v869 = vpop.permute.xlu0 %868
      %872 = vset.pattern.permute.xlu0 0
      %873 = vperm.xlu0 %872, %v819
      %v874 = vpop.permute.xlu0 %873
      %v877 = vsel %vm669, %v821, 0
      %v880 = vsel %vm669, %v823, 0
      %v883 = vsel %vm669, %v825, 0
      %v886 = vsel %vm669, %v827, 0
      %v889 = vsel %vm669, %v829, 0
      %v892 = vsel %vm669, %v831, 0
      %v895 = vsel %vm669, %v833, 0
      %v898 = vsel %vm669, %v835, 0
      %900 = vmatpush.msra.mxu0 %v801
      %901 = vmatpush.msra.mxu0 %v799
      %902 = vmatpush.msra.mxu0 %v797
      %903 = vmatpush.msra.mxu0 %v795
      %904 = vmatpush.msra.mxu0 %v787
      %905 = vmatpush.msra.mxu0 %v785
      %906 = vmatpush.msra.mxu0 %v783
      %907 = vmatpush.msra.mxu0 %v781
      %908 = vmatpush.msra.mxu0 %v779
      %909 = vmatpush.msra.mxu0 %v777
      %910 = vmatpush.msra.mxu0 %v769
      %911 = vmatpush.msra.mxu0 %v768
      %912 = vmatpush.msra.mxu0 %v767
      %913 = vmatpush.msra.mxu0 %v766
      %914 = vmatpush.msra.mxu0 %v765
      %915 = vmatpush.msra.mxu0 %v764
      %916 = vmatmul.f32.gmra.mxu0 %v820
      %v917 = vpop.f32.mrf.mxu0
      %v918 = vadd.f32 %v839, %v917
      %919 = vmatmul.f32.gmra.mxu0 %v822
      %v920 = vpop.f32.mrf.mxu0
      %v921 = vadd.f32 %v844, %v920
      %922 = vmatmul.f32.gmra.mxu0 %v824
      %v923 = vpop.f32.mrf.mxu0
      %v924 = vadd.f32 %v849, %v923
      %925 = vmatmul.f32.gmra.mxu0 %v826
      %v926 = vpop.f32.mrf.mxu0
      %v927 = vadd.f32 %v854, %v926
      %928 = vmatmul.f32.gmra.mxu0 %v828
      %v929 = vpop.f32.mrf.mxu0
      %v930 = vadd.f32 %v859, %v929
      %931 = vmatmul.f32.gmra.mxu0 %v830
      %v932 = vpop.f32.mrf.mxu0
      %v933 = vadd.f32 %v864, %v932
      %934 = vmatmul.f32.gmra.mxu0 %v832
      %v935 = vpop.f32.mrf.mxu0
      %v936 = vadd.f32 %v869, %v935
      %937 = vmatmul.f32.gmra.mxu0 %v834
      %v938 = vpop.f32.mrf.mxu0
      %v939 = vadd.f32 %v874, %v938
      %940 = vdwg.mxu0
      %941 = vmatpush.msra.mxu0 0.0
      %942 = vmatpush.msra.mxu0 0.0
      %943 = vmatpush.msra.mxu0 0.0
      %944 = vmatpush.msra.mxu0 0.0
      %945 = vmatpush.msra.mxu0 0.0
      %946 = vmatpush.msra.mxu0 0.0
      %947 = vmatpush.msra.mxu0 0.0
      %948 = vmatpush.msra.mxu0 0.0
      %949 = vmatpush.msra.mxu0 0.0
      %950 = vmatpush.msra.mxu0 0.0
      %951 = vmatpush.msra.mxu0 0.0
      %952 = vmatpush.msra.mxu0 0.0
      %953 = vmatpush.msra.mxu0 0.0
      %954 = vmatpush.msra.mxu0 0.0
      %955 = vmatpush.msra.mxu0 %v805
      %956 = vmatpush.msra.mxu0 %v803
      %957 = vmatmul.f32.gmra.mxu0 %v877
      %v958 = vpop.f32.mrf.mxu0
      %v959 = vadd.f32 %v918, %v958
      %960 = vmatmul.f32.gmra.mxu0 %v880
      %v961 = vpop.f32.mrf.mxu0
      %v962 = vadd.f32 %v921, %v961
      %963 = vmatmul.f32.gmra.mxu0 %v883
      %v964 = vpop.f32.mrf.mxu0
      %v965 = vadd.f32 %v924, %v964
      %966 = vmatmul.f32.gmra.mxu0 %v886
      %v967 = vpop.f32.mrf.mxu0
      %v968 = vadd.f32 %v927, %v967
      %969 = vmatmul.f32.gmra.mxu0 %v889
      %v970 = vpop.f32.mrf.mxu0
      %v971 = vadd.f32 %v930, %v970
      %972 = vmatmul.f32.gmra.mxu0 %v892
      %v973 = vpop.f32.mrf.mxu0
      %v974 = vadd.f32 %v933, %v973
      %975 = vmatmul.f32.gmra.mxu0 %v895
      %v976 = vpop.f32.mrf.mxu0
      %v977 = vadd.f32 %v936, %v976
      %978 = vmatmul.f32.gmra.mxu0 %v898
      %v979 = vpop.f32.mrf.mxu0
      %v980 = vadd.f32 %v939, %v979
      %981 = vdwg.mxu0
      %v982 = vmax.f32 %v959, 0.0
      %v983 = vmax.f32 %v962, 0.0
      %v984 = vmax.f32 %v965, 0.0
      %v985 = vmax.f32 %v968, 0.0
      %v986 = vmax.f32 %v971, 0.0
      %v987 = vmax.f32 %v974, 0.0
      %v988 = vmax.f32 %v977, 0.0
      %v989 = vmax.f32 %v980, 0.0
      %v990 = vld [vmem:[%s5] sm:$0xff]
      %v991 = vld [vmem:[%s5 + $0x8] sm:$0xff]
      %v992 = vld [vmem:[%s5 + $0x10] sm:$0xff]
      %v993 = vld [vmem:[%s5 + $0x18] sm:$0xff]
      %v994 = vld [vmem:[%s5 + $0x20] sm:$0xff]
      %v995 = vld [vmem:[%s5 + $0x28] sm:$0xff]
      %v996 = vld [vmem:[%s5 + $0x30] sm:$0xff]
      %v997 = vld [vmem:[%s5 + $0x38] sm:$0xff]
      %v998 = vld [vmem:[%s6 + $0xd0] sm:$0xff]
      %v999 = vld [vmem:[%s6 + $0xd8] sm:$0xff]
      %v1000 = vld [vmem:[%s6 + $0xe0] sm:$0xff]
      %v1001 = vld [vmem:[%s6 + $0xe8] sm:$0xff]
      %v1002 = vld [vmem:[%s6 + $0xf0] sm:$0xff]
      %v1003 = vld [vmem:[%s6 + $0xf8] sm:$0xff]
      %v1004 = vld [vmem:[%s6 + $0x100] sm:$0xff]
      %v1005 = vld [vmem:[%s6 + $0x108] sm:$0xff]
      %1007 = vset.pattern.permute.xlu0 0
      %1008 = vperm.xlu0 %1007, %v998
      %v1009 = vpop.permute.xlu0 %1008
      %1012 = vset.pattern.permute.xlu0 0
      %1013 = vperm.xlu0 %1012, %v999
      %v1014 = vpop.permute.xlu0 %1013
      %1017 = vset.pattern.permute.xlu0 0
      %1018 = vperm.xlu0 %1017, %v1000
      %v1019 = vpop.permute.xlu0 %1018
      %1022 = vset.pattern.permute.xlu0 0
      %1023 = vperm.xlu0 %1022, %v1001
      %v1024 = vpop.permute.xlu0 %1023
      %1027 = vset.pattern.permute.xlu0 0
      %1028 = vperm.xlu0 %1027, %v1002
      %v1029 = vpop.permute.xlu0 %1028
      %1032 = vset.pattern.permute.xlu0 0
      %1033 = vperm.xlu0 %1032, %v1003
      %v1034 = vpop.permute.xlu0 %1033
      %1037 = vset.pattern.permute.xlu0 0
      %1038 = vperm.xlu0 %1037, %v1004
      %v1039 = vpop.permute.xlu0 %1038
      %1042 = vset.pattern.permute.xlu0 0
      %1043 = vperm.xlu0 %1042, %v1005
      %v1044 = vpop.permute.xlu0 %1043
      %vm1046 = vcmask 392192
      %v1048 = vsel %vm1046, %v990, 0
      %v1051 = vsel %vm1046, %v991, 0
      %v1054 = vsel %vm1046, %v992, 0
      %v1057 = vsel %vm1046, %v993, 0
      %v1060 = vsel %vm1046, %v994, 0
      %v1063 = vsel %vm1046, %v995, 0
      %v1066 = vsel %vm1046, %v996, 0
      %v1069 = vsel %vm1046, %v997, 0
      %1071 = vmatpush.msra.mxu0 0.0
      %1072 = vmatpush.msra.mxu0 0.0
      %1073 = vmatpush.msra.mxu0 0.0
      %1074 = vmatpush.msra.mxu0 0.0
      %1075 = vmatpush.msra.mxu0 0.0
      %1076 = vmatpush.msra.mxu0 0.0
      %1077 = vmatpush.msra.mxu0 0.0
      %1078 = vmatpush.msra.mxu0 0.0
      %1079 = vmatpush.msra.mxu0 0.0
      %1080 = vmatpush.msra.mxu0 0.0
      %1081 = vmatpush.msra.mxu0 %v805
      %1082 = vmatpush.msra.mxu0 %v803
      %1083 = vmatpush.msra.mxu0 %v801
      %1084 = vmatpush.msra.mxu0 %v799
      %1085 = vmatpush.msra.mxu0 %v797
      %1086 = vmatpush.msra.mxu0 %v795
      %1087 = vmatmul.f32.gmra.mxu0 %v1048
      %v1088 = vpop.f32.mrf.mxu0
      %v1089 = vadd.f32 %v1009, %v1088
      %1090 = vmatmul.f32.gmra.mxu0 %v1051
      %v1091 = vpop.f32.mrf.mxu0
      %v1092 = vadd.f32 %v1014, %v1091
      %1093 = vmatmul.f32.gmra.mxu0 %v1054
      %v1094 = vpop.f32.mrf.mxu0
      %v1095 = vadd.f32 %v1019, %v1094
      %1096 = vmatmul.f32.gmra.mxu0 %v1057
      %v1097 = vpop.f32.mrf.mxu0
      %v1098 = vadd.f32 %v1024, %v1097
      %1099 = vmatmul.f32.gmra.mxu0 %v1060
      %v1100 = vpop.f32.mrf.mxu0
      %v1101 = vadd.f32 %v1029, %v1100
      %1102 = vmatmul.f32.gmra.mxu0 %v1063
      %v1103 = vpop.f32.mrf.mxu0
      %v1104 = vadd.f32 %v1034, %v1103
      %1105 = vmatmul.f32.gmra.mxu0 %v1066
      %v1106 = vpop.f32.mrf.mxu0
      %v1107 = vadd.f32 %v1039, %v1106
      %1108 = vmatmul.f32.gmra.mxu0 %v1069
      %v1109 = vpop.f32.mrf.mxu0
      %v1110 = vadd.f32 %v1044, %v1109
      %1111 = vdwg.mxu0
      %v1112 = vadd.f32 %v982, %v1089
      %v1113 = vadd.f32 %v983, %v1092
      %v1114 = vadd.f32 %v984, %v1095
      %v1115 = vadd.f32 %v985, %v1098
      %v1116 = vadd.f32 %v986, %v1101
      %v1117 = vadd.f32 %v987, %v1104
      %v1118 = vadd.f32 %v988, %v1107
      %v1119 = vadd.f32 %v989, %v1110
      %vm1120 = vcmask 457728
      %1121 = vst.msk [vmem:[%s278] sm:$0xff] %vm1120, %v1112
      %1122 = vst.msk [vmem:[%s278 + $0x8] sm:$0xff] %vm1120, %v1113
      %1123 = vst.msk [vmem:[%s278 + $0x10] sm:$0xff] %vm1120, %v1114
      %1124 = vst.msk [vmem:[%s278 + $0x18] sm:$0xff] %vm1120, %v1115
      %1125 = vst.msk [vmem:[%s278 + $0x20] sm:$0xff] %vm1120, %v1116
      %1126 = vst.msk [vmem:[%s278 + $0x28] sm:$0xff] %vm1120, %v1117
      %1127 = vst.msk [vmem:[%s278 + $0x30] sm:$0xff] %vm1120, %v1118
      %1128 = vst.msk [vmem:[%s278 + $0x38] sm:$0xff] %vm1120, %v1119
      %p1129 = scmp.lt.s32.totalorder %s18, 1
      %s1130 = scalar_select %p1129, %s18, 1
      %s1131 = smul.addr %s1130, 8
      %s1132 = smul.addr %s1131, 8
      %s1133 = scalar_lea.vmem %s7, %s1132
      // Predicated region
      $region49: #{tpu_custom_call.1} parent=47 // pred_check
        %p1134 = pneg %p188
      $region50: #{tpu_custom_call.1} parent=47 // pred_check_branch
        %1136 = sbr.rel (%p1134) target = $region52
      $region51: #{tpu_custom_call.1} parent=47 // pred_region
        _
      $region52: #{tpu_custom_call.1} parent=47 // pred_fallthru
        _
    $region48: #{tpu_custom_call.1} parent=5 // pred_fallthru
      _
    %p1137 = scmp.le.s32.totalorder 2, %s13
    // Predicated region
    $region53: #{tpu_custom_call.1} parent=5 // pred_check
      %p1138 = pneg %p1137
    $region54: #{tpu_custom_call.1} parent=5 // pred_check_branch
      %1140 = sbr.rel (%p1138) target = $region56
    $region55: #{tpu_custom_call.1} parent=5 // pred_region
      %s1141 = ssub.s32 %s13, 2
      // Predicated region
      $region57: #{tpu_custom_call.1} parent=55 // pred_check
        %p1142 = pneg %p194
      $region58: #{tpu_custom_call.1} parent=55 // pred_check_branch
        %1144 = sbr.rel (%p1142) target = $region60
      $region59: #{tpu_custom_call.1} parent=55 // pred_region
        %p1145 = scmp.lt.s32.totalorder %s19, 1
        %s1146 = scalar_select %p1145, %s19, 1
        %s1147 = smul.addr %s1146, 8
        %s1148 = smul.addr %s1147, 8
        %s1149 = scalar_lea.vmem %s7, %s1148
      $region60: #{tpu_custom_call.1} parent=55 // pred_fallthru
        _
    $region56: #{tpu_custom_call.1} parent=5 // pred_fallthru
      _
  $region6: #{tpu_custom_call.1} parent=0 // loop_footer
    %s17 = sadd.s32 1, %s13
  $region7: #{tpu_custom_call.1} parent=0 // loop_footer_branch
    %12 = sbr.rel target = $region3
  $region8: #{tpu_custom_call.1} parent=0 // loop_exit
    _

</llo_original>
